<compile_context>
chip_gen: v7x
topology: tpu7x:2x2x1
jax: 0.10.0
libtpu: 0.0.40
codegen_flags: <defaults>
</compile_context>

<pallas_src>
import functools

import jax
import jax.numpy as jnp
from jax.experimental import pallas as pl
from jax.experimental.pallas import tpu as pltpu

HIDDEN = 512
OUT_PAD = 128          # lane-dense output width (real output_dim = 3)
DEFAULT_TB = 1024      # batch tile for large batches (multiple of 256: MXU-friendly)


def _round_up(x, m):
    return (x + m - 1) // m * m


def _choose_tb(batch):
    """Batch tile: DEFAULT_TB for big batches; otherwise aim for >=2 grid steps
    (v7x megacore) while keeping a multiple of 16 (bf16 sublane packing)."""
    if batch >= 2 * DEFAULT_TB:
        return DEFAULT_TB
    tb = _round_up(max((batch + 1) // 2, 8), 16)
    return min(DEFAULT_TB, tb)


def _mlp_kernel(x_ref, w1_ref, b1_ref, w2_ref, b2_ref, w3_ref, b3_ref, o_ref):
    # Cast the x tile to bf16 in-kernel (input stays f32 / unpadded in HBM).
    x = x_ref[...].astype(jnp.bfloat16)
    # Layer 1: Linear(D_in, 512) + ReLU   (bf16 operands, f32 MXU accumulation)
    h1 = jnp.dot(x, w1_ref[...], preferred_element_type=jnp.float32)
    h1 = jnp.maximum(h1 + b1_ref[...], 0.0)
    # Layer 2: Linear(512, 512) + ReLU
    h2 = jnp.dot(h1.astype(jnp.bfloat16), w2_ref[...],
                 preferred_element_type=jnp.float32)
    h2 = jnp.maximum(h2 + b2_ref[...], 0.0)
    # Layer 3: Linear(512, 3) padded to 128 lanes; store as bf16 (lane-dense vst)
    out = jnp.dot(h2.astype(jnp.bfloat16), w3_ref[...],
                  preferred_element_type=jnp.float32)
    o_ref[...] = (out + b3_ref[...]).astype(o_ref.dtype)


def prepare_params(params, input_dim, output_dim=3):
    """One-time casting / lane-padding of params (hoisted out of forward)."""
    w3 = jnp.zeros((HIDDEN, OUT_PAD), jnp.float32).at[:, :output_dim].set(params["w3"])
    b3 = jnp.zeros((1, OUT_PAD), jnp.float32).at[:, :output_dim].set(params["b3"])
    return {
        "w1": params["w1"].astype(jnp.bfloat16),                       # (D_in, 512)
        "b1": params["b1"].reshape(1, HIDDEN).astype(jnp.float32),
        "w2": params["w2"].astype(jnp.bfloat16),                       # (512, 512)
        "b2": params["b2"].reshape(1, HIDDEN).astype(jnp.float32),
        "w3": w3.astype(jnp.bfloat16),                                 # (512, 128)
        "b3": b3,                                                      # (1, 128) f32
        "output_dim": output_dim,
    }


@functools.partial(jax.jit, static_argnames=("output_dim",))
def _forward_impl(x, w1, b1, w2, b2, w3, b3, *, output_dim):
    B, D_in = x.shape
    tb = _choose_tb(B)

    # Only pad rows for tiny batches (B < one tile) so a block never exceeds
    # the array; otherwise pass x through untouched and use a partial last block.
    b_rows = max(B, tb)
    if b_rows != B:
        x_in = jnp.zeros((b_rows, D_in), x.dtype).at[:B].set(x)
    else:
        x_in = x

    grid = (pl.cdiv(b_rows, tb),)

    out_padded = pl.pallas_call(
        _mlp_kernel,
        out_shape=jax.ShapeDtypeStruct((b_rows, OUT_PAD), jnp.bfloat16),
        grid_spec=pltpu.PrefetchScalarGridSpec(
            num_scalar_prefetch=0,
            grid=grid,
            in_specs=[
                pl.BlockSpec((tb, D_in), lambda i: (i, 0)),        # x tile (f32)
                pl.BlockSpec((D_in, HIDDEN), lambda i: (0, 0)),    # w1 (VMEM-resident)
                pl.BlockSpec((1, HIDDEN), lambda i: (0, 0)),       # b1
                pl.BlockSpec((HIDDEN, HIDDEN), lambda i: (0, 0)),  # w2
                pl.BlockSpec((1, HIDDEN), lambda i: (0, 0)),       # b2
                pl.BlockSpec((HIDDEN, OUT_PAD), lambda i: (0, 0)), # w3 (lane-padded)
                pl.BlockSpec((1, OUT_PAD), lambda i: (0, 0)),      # b3
            ],
            out_specs=pl.BlockSpec((tb, OUT_PAD), lambda i: (i, 0)),
        ),
        compiler_params=pltpu.CompilerParams(
            dimension_semantics=("parallel",),
            vmem_limit_bytes=64 * 1024 * 1024,
        ),
    )(x_in, w1, b1, w2, b2, w3, b3)

    # Slice the 3 real output columns / B real rows, cast back to f32.
    return out_padded[:B, :output_dim].astype(jnp.float32)


def pretrain_net_forward(x, prepped):
    """x: (B, input_dim) f32.  prepped: output of prepare_params.  Returns (B, 3) f32."""
    return _forward_impl(
        x,
        prepped["w1"], prepped["b1"],
        prepped["w2"], prepped["b2"],
        prepped["w3"], prepped["b3"],
        output_dim=prepped["output_dim"],
    )


def init_params(key, input_dim, output_dim=3):
    """Deterministic init mimicking PyTorch nn.Linear defaults (uniform +/- 1/sqrt(fan_in))."""
    ks = jax.random.split(key, 6)

    def lin(kw, kb, fan_in, fan_out):
        bound = 1.0 / jnp.sqrt(fan_in)
        w = jax.random.uniform(kw, (fan_in, fan_out), jnp.float32, -bound, bound)
        b = jax.random.uniform(kb, (fan_out,), jnp.float32, -bound, bound)
        return w, b

    w1, b1 = lin(ks[0], ks[1], input_dim, HIDDEN)
    w2, b2 = lin(ks[2], ks[3], HIDDEN, HIDDEN)
    w3, b3 = lin(ks[4], ks[5], HIDDEN, output_dim)
    return {"w1": w1, "b1": b1, "w2": w2, "b2": b2, "w3": w3, "b3": b3}


def reference_forward(x, p):
    h1 = jnp.maximum(x @ p["w1"] + p["b1"], 0.0)
    h2 = jnp.maximum(h1 @ p["w2"] + p["b2"], 0.0)
    return h2 @ p["w3"] + p["b3"]


if __name__ == "__main__":
    key = jax.random.PRNGKey(0)
    k_x, k_p, k_x2 = jax.random.split(key, 3)

    batch, input_dim, output_dim = 8, 32, 3
    x = jax.random.normal(k_x, (batch, input_dim), jnp.float32)
    params = init_params(k_p, input_dim, output_dim)
    prepped = prepare_params(params, input_dim, output_dim)

    out = pretrain_net_forward(x, prepped)
    out = jax.block_until_ready(out)
    ref = reference_forward(x, params)
    assert out.shape == (batch, output_dim)
    # bf16 matmul operands + bf16 output store with f32 accumulation -> ~1e-2 rel error.
    assert jnp.allclose(out, ref, atol=5e-2, rtol=5e-2), (
        f"max abs err {jnp.max(jnp.abs(out - ref))}"
    )

    # Second shape: exercises 2 grid steps with a partial last block (no batch pad).
    batch2 = 40
    x2 = jax.random.normal(k_x2, (batch2, input_dim), jnp.float32)
    out2 = jax.block_until_ready(pretrain_net_forward(x2, prepped))
    ref2 = reference_forward(x2, params)
    assert out2.shape == (batch2, output_dim)
    assert jnp.allclose(out2, ref2, atol=5e-2, rtol=5e-2), (
        f"max abs err {jnp.max(jnp.abs(out2 - ref2))}"
    )

    print("KERNEL_OK")
</pallas_src>

<mosaic_0001>
module attributes {stable_mosaic.version = 11 : i64} {
  func.func @_mlp_kernel(%arg0: i32, %arg1: memref<16x32xf32, #tpu.memory_space<vmem>>, %arg2: memref<32x512xbf16, #tpu.memory_space<vmem>>, %arg3: memref<1x512xf32, #tpu.memory_space<vmem>>, %arg4: memref<512x512xbf16, #tpu.memory_space<vmem>>, %arg5: memref<1x512xf32, #tpu.memory_space<vmem>>, %arg6: memref<512x128xbf16, #tpu.memory_space<vmem>>, %arg7: memref<1x128xf32, #tpu.memory_space<vmem>>, %arg8: memref<16x128xbf16, #tpu.memory_space<vmem>>) attributes {dimension_semantics = [#tpu.dimension_semantics<parallel>], iteration_bounds = array<i64: 1>, scalar_prefetch = 0 : i64, scratch_operands = 0 : i64, tpu.core_type = #tpu.core_type<tc>, window_params = [{transform_indices = @transform_0, window_bounds = array<i64: 16, 32>}, {pipeline_mode = #tpu.pipeline_mode<synchronous>, transform_indices = @transform_1, window_bounds = array<i64: 32, 512>}, {pipeline_mode = #tpu.pipeline_mode<synchronous>, transform_indices = @transform_2, window_bounds = array<i64: 1, 512>}, {pipeline_mode = #tpu.pipeline_mode<synchronous>, transform_indices = @transform_3, window_bounds = array<i64: 512, 512>}, {pipeline_mode = #tpu.pipeline_mode<synchronous>, transform_indices = @transform_4, window_bounds = array<i64: 1, 512>}, {pipeline_mode = #tpu.pipeline_mode<synchronous>, transform_indices = @transform_5, window_bounds = array<i64: 512, 128>}, {pipeline_mode = #tpu.pipeline_mode<synchronous>, transform_indices = @transform_6, window_bounds = array<i64: 1, 128>}, {transform_indices = @transform_7, window_bounds = array<i64: 16, 128>}]} {
    %c0 = arith.constant 0 : index
    %c0_0 = arith.constant 0 : index
    %0 = vector.load %arg1[%c0, %c0_0] : memref<16x32xf32, #tpu.memory_space<vmem>>, vector<16x32xf32>
    %1 = arith.truncf %0 : vector<16x32xf32> to vector<16x32xbf16>
    %c0_1 = arith.constant 0 : index
    %c0_2 = arith.constant 0 : index
    %2 = vector.load %arg2[%c0_1, %c0_2] : memref<32x512xbf16, #tpu.memory_space<vmem>>, vector<32x512xbf16>
    %cst = arith.constant dense<0.000000e+00> : vector<16x512xf32>
    %3 = tpu.matmul %1, %2, %cst {dimension_numbers = #tpu.dot_dimension_numbers<[1], [0], [0], [1], [0, 0, 1, 1], [], []>} : vector<16x32xbf16>, vector<32x512xbf16>, vector<16x512xf32> -> vector<16x512xf32>
    %c0_3 = arith.constant 0 : index
    %c0_4 = arith.constant 0 : index
    %4 = vector.load %arg3[%c0_3, %c0_4] : memref<1x512xf32, #tpu.memory_space<vmem>>, vector<1x512xf32>
    %5 = vector.broadcast %4 : vector<1x512xf32> to vector<16x512xf32>
    %6 = arith.addf %3, %5 : vector<16x512xf32>
    %cst_5 = arith.constant 0.000000e+00 : f32
    %7 = vector.broadcast %cst_5 : f32 to vector<16x512xf32>
    %8 = arith.maximumf %6, %7 : vector<16x512xf32>
    %9 = arith.truncf %8 : vector<16x512xf32> to vector<16x512xbf16>
    %c0_6 = arith.constant 0 : index
    %c0_7 = arith.constant 0 : index
    %10 = vector.load %arg4[%c0_6, %c0_7] : memref<512x512xbf16, #tpu.memory_space<vmem>>, vector<512x512xbf16>
    %cst_8 = arith.constant dense<0.000000e+00> : vector<16x512xf32>
    %11 = tpu.matmul %9, %10, %cst_8 {dimension_numbers = #tpu.dot_dimension_numbers<[1], [0], [0], [1], [0, 0, 1, 1], [], []>} : vector<16x512xbf16>, vector<512x512xbf16>, vector<16x512xf32> -> vector<16x512xf32>
    %c0_9 = arith.constant 0 : index
    %c0_10 = arith.constant 0 : index
    %12 = vector.load %arg5[%c0_9, %c0_10] : memref<1x512xf32, #tpu.memory_space<vmem>>, vector<1x512xf32>
    %13 = vector.broadcast %12 : vector<1x512xf32> to vector<16x512xf32>
    %14 = arith.addf %11, %13 : vector<16x512xf32>
    %cst_11 = arith.constant 0.000000e+00 : f32
    %15 = vector.broadcast %cst_11 : f32 to vector<16x512xf32>
    %16 = arith.maximumf %14, %15 : vector<16x512xf32>
    %17 = arith.truncf %16 : vector<16x512xf32> to vector<16x512xbf16>
    %c0_12 = arith.constant 0 : index
    %c0_13 = arith.constant 0 : index
    %18 = vector.load %arg6[%c0_12, %c0_13] : memref<512x128xbf16, #tpu.memory_space<vmem>>, vector<512x128xbf16>
    %cst_14 = arith.constant dense<0.000000e+00> : vector<16x128xf32>
    %19 = tpu.matmul %17, %18, %cst_14 {dimension_numbers = #tpu.dot_dimension_numbers<[1], [0], [0], [1], [0, 0, 1, 1], [], []>} : vector<16x512xbf16>, vector<512x128xbf16>, vector<16x128xf32> -> vector<16x128xf32>
    %c0_15 = arith.constant 0 : index
    %c0_16 = arith.constant 0 : index
    %20 = vector.load %arg7[%c0_15, %c0_16] : memref<1x128xf32, #tpu.memory_space<vmem>>, vector<1x128xf32>
    %21 = vector.broadcast %20 : vector<1x128xf32> to vector<16x128xf32>
    %22 = arith.addf %19, %21 : vector<16x128xf32>
    %23 = arith.truncf %22 : vector<16x128xf32> to vector<16x128xbf16>
    %c0_17 = arith.constant 0 : index
    %c0_18 = arith.constant 0 : index
    %24 = vector.load %arg8[%c0_17, %c0_18] : memref<16x128xbf16, #tpu.memory_space<vmem>>, vector<16x128xbf16>
    tpu.vector_store %arg8[%c0_17, %c0_18], %23 {strides = array<i32>} : memref<16x128xbf16, #tpu.memory_space<vmem>>, vector<16x128xbf16>,
    return
  }
  func.func @transform_0(%arg0: i32) -> (i32, i32) {
    %c0_i32 = arith.constant 0 : i32
    %c0_i32_0 = arith.constant 0 : i32
    return %arg0, %c0_i32 : i32, i32
  }
  func.func @transform_1(%arg0: i32) -> (i32, i32) {
    %c0_i32 = arith.constant 0 : i32
    %c0_i32_0 = arith.constant 0 : i32
    %c0_i32_1 = arith.constant 0 : i32
    return %c0_i32, %c0_i32_0 : i32, i32
  }
  func.func @transform_2(%arg0: i32) -> (i32, i32) {
    %c0_i32 = arith.constant 0 : i32
    %c0_i32_0 = arith.constant 0 : i32
    %c0_i32_1 = arith.constant 0 : i32
    return %c0_i32, %c0_i32_0 : i32, i32
  }
  func.func @transform_3(%arg0: i32) -> (i32, i32) {
    %c0_i32 = arith.constant 0 : i32
    %c0_i32_0 = arith.constant 0 : i32
    %c0_i32_1 = arith.constant 0 : i32
    return %c0_i32, %c0_i32_0 : i32, i32
  }
  func.func @transform_4(%arg0: i32) -> (i32, i32) {
    %c0_i32 = arith.constant 0 : i32
    %c0_i32_0 = arith.constant 0 : i32
    %c0_i32_1 = arith.constant 0 : i32
    return %c0_i32, %c0_i32_0 : i32, i32
  }
  func.func @transform_5(%arg0: i32) -> (i32, i32) {
    %c0_i32 = arith.constant 0 : i32
    %c0_i32_0 = arith.constant 0 : i32
    %c0_i32_1 = arith.constant 0 : i32
    return %c0_i32, %c0_i32_0 : i32, i32
  }
  func.func @transform_6(%arg0: i32) -> (i32, i32) {
    %c0_i32 = arith.constant 0 : i32
    %c0_i32_0 = arith.constant 0 : i32
    %c0_i32_1 = arith.constant 0 : i32
    return %c0_i32, %c0_i32_0 : i32, i32
  }
  func.func @transform_7(%arg0: i32) -> (i32, i32) {
    %c0_i32 = arith.constant 0 : i32
    %c0_i32_0 = arith.constant 0 : i32
    return %arg0, %c0_i32 : i32, i32
  }
}

</mosaic_0001>

<llo_original>
// kernel: _forward_impl.1
$region0: #{_forward_impl.1}
  #allocation0 [shape = 'u32[]', space=smem, size = 0x4, offset = 0x4, fixed_abs, tag = 'smem constant byte address 0x4 - core index']
  #allocation1 [shape = 'u32[144,128]{1,0:T(1,128)}', space=vmem, size = 0x12000, scoped, tag = 'internal scratch']
  %s0 = inlined_call_operand.hbm [shape: f32[16,32], index: 0, kind: input, shape index: {}]
  %s1 = inlined_call_operand.hbm [shape: bf16[32,512], index: 1, kind: input, shape index: {}]
  %s2 = inlined_call_operand.hbm [shape: f32[1,512], index: 2, kind: input, shape index: {}]
  %s3 = inlined_call_operand.hbm [shape: bf16[512,512], index: 3, kind: input, shape index: {}]
  %s4 = inlined_call_operand.hbm [shape: f32[1,512], index: 4, kind: input, shape index: {}]
  %s5 = inlined_call_operand.hbm [shape: bf16[512,128], index: 5, kind: input, shape index: {}]
  %s6 = inlined_call_operand.hbm [shape: f32[1,128], index: 6, kind: input, shape index: {}]
  %s7 = inlined_call_operand.hbm [shape: bf16[16,128], index: 7, kind: output, shape index: {}]
  %s8 = sld [smem:[#allocation0]]
  $region66: #{_forward_impl.1} parent=0
    _
  %s10 = ssub.s32 1, %s8
  %s11 = scalar_select 0, %s10, %s8
  $region1: #{_forward_impl.1} parent=0
    #allocation2 [shape = 'u8[8192]{0}', space=vmem, size = 0x2000, scoped, tag = 'input window, operand 0, single buffered']
    #allocation3 [shape = 's32[1]{0}', space=sflag, size = 0x4, scoped, tag = 'scoped memory for _forward_impl.1']
    #allocation4 [shape = 's32[1]{0}', space=sflag, size = 0x4, scoped, tag = 'scoped memory for _forward_impl.1']
    #allocation5 [shape = 'u8[32768]{0}', space=vmem, size = 0x8000, scoped, tag = 'input window, operand 1, single buffered']
    #allocation6 [shape = 's32[1]{0}', space=sflag, size = 0x4, scoped, tag = 'scoped memory for _forward_impl.1']
    #allocation7 [shape = 'u8[2048]{0}', space=vmem, size = 0x800, scoped, tag = 'input window, operand 2, single buffered']
    #allocation8 [shape = 'u8[524288]{0}', space=vmem, size = 0x80000, scoped, tag = 'input window, operand 3, single buffered']
    #allocation9 [shape = 's32[1]{0}', space=sflag, size = 0x4, scoped, tag = 'scoped memory for _forward_impl.1']
    #allocation10 [shape = 'u8[2048]{0}', space=vmem, size = 0x800, scoped, tag = 'input window, operand 4, single buffered']
    #allocation11 [shape = 'u8[131072]{0}', space=vmem, size = 0x20000, scoped, tag = 'input window, operand 5, single buffered']
    #allocation12 [shape = 's32[1]{0}', space=sflag, size = 0x4, scoped, tag = 'scoped memory for _forward_impl.1']
    #allocation13 [shape = 'u8[512]{0}', space=vmem, size = 0x400, scoped, tag = 'input window, operand 6, single buffered']
    #allocation14 [shape = 'u8[4096]{0}', space=vmem, size = 0x1000, scoped, tag = 'output window, operand 0, single buffered']
    %12 = vsyncpa [#allocation3], 0
    %13 = vsyncpa [#allocation6], 0
    %14 = vsyncpa [#allocation9], 0
    %15 = vsyncpa [#allocation12], 0
    %16 = vsyncpa [#allocation4], 0
    // Predicated region
    $region2: #{_forward_impl.1} parent=1 // pred_check
      _
    $region3: #{_forward_impl.1} parent=1 // pred_check_branch
      %18 = sbr.rel (0) target = $region5
    $region4: #{_forward_impl.1} parent=1 // pred_region
      %s20 = ssub.s32 256, 256
      %21 = vsyncadd [#allocation3], %s20
      %s22 = sshll.u32 [#allocation2], 4
      %s23 = int_to_ptr.vmem [resolvable:$true] %s22
      %28 = dma.hbm_to_vmem [thread:$0]  %s0, 256, %s23, [#allocation3], 128, 128, 8
    $region5: #{_forward_impl.1} parent=1 // pred_fallthru
      _
    // Predicated region
    $region6: #{_forward_impl.1} parent=1 // pred_check
      _
    $region7: #{_forward_impl.1} parent=1 // pred_check_branch
      %30 = sbr.rel (0) target = $region9
    $region8: #{_forward_impl.1} parent=1 // pred_region
      %s32 = ssub.s32 1024, 1024
      %33 = vsyncadd [#allocation6], %s32
      %s34 = sshll.u32 [#allocation5], 4
      %s35 = int_to_ptr.vmem [resolvable:$true] %s34
      %40 = dma.hbm_to_vmem [thread:$0]  %s1, 1024, %s35, [#allocation6], 256, 256, 16
    $region9: #{_forward_impl.1} parent=1 // pred_fallthru
      _
    // Predicated region
    $region10: #{_forward_impl.1} parent=1 // pred_check
      _
    $region11: #{_forward_impl.1} parent=1 // pred_check_branch
      %42 = sbr.rel (0) target = $region13
    $region12: #{_forward_impl.1} parent=1 // pred_region
      %s44 = ssub.s32 64, 64
      %45 = vsyncadd [#allocation6], %s44
      %s47 = sshll.u32 [#allocation7], 4
      %s48 = int_to_ptr.vmem [resolvable:$true] %s47
      %50 = dma.hbm_to_vmem [thread:$0]  %s2, 64, %s48, [#allocation6]
    $region13: #{_forward_impl.1} parent=1 // pred_fallthru
      _
    // Predicated region
    $region14: #{_forward_impl.1} parent=1 // pred_check
      _
    $region15: #{_forward_impl.1} parent=1 // pred_check_branch
      %52 = sbr.rel (0) target = $region17
    $region16: #{_forward_impl.1} parent=1 // pred_region
      %s54 = ssub.s32 16384, 16384
      %55 = vsyncadd [#allocation9], %s54
      %s56 = sshll.u32 [#allocation8], 4
      %s57 = int_to_ptr.vmem [resolvable:$true] %s56
      %62 = dma.hbm_to_vmem [thread:$0]  %s3, 16384, %s57, [#allocation9], 256, 256, 16
    $region17: #{_forward_impl.1} parent=1 // pred_fallthru
      _
    // Predicated region
    $region18: #{_forward_impl.1} parent=1 // pred_check
      _
    $region19: #{_forward_impl.1} parent=1 // pred_check_branch
      %64 = sbr.rel (0) target = $region21
    $region20: #{_forward_impl.1} parent=1 // pred_region
      %s66 = ssub.s32 64, 64
      %67 = vsyncadd [#allocation9], %s66
      %s69 = sshll.u32 [#allocation10], 4
      %s70 = int_to_ptr.vmem [resolvable:$true] %s69
      %72 = dma.hbm_to_vmem [thread:$0]  %s4, 64, %s70, [#allocation9]
    $region21: #{_forward_impl.1} parent=1 // pred_fallthru
      _
    // Predicated region
    $region22: #{_forward_impl.1} parent=1 // pred_check
      _
    $region23: #{_forward_impl.1} parent=1 // pred_check_branch
      %74 = sbr.rel (0) target = $region25
    $region24: #{_forward_impl.1} parent=1 // pred_region
      %s76 = ssub.s32 4096, 4096
      %77 = vsyncadd [#allocation12], %s76
      %s78 = sshll.u32 [#allocation11], 4
      %s79 = int_to_ptr.vmem [resolvable:$true] %s78
      %84 = dma.hbm_to_vmem [thread:$0]  %s5, 4096, %s79, [#allocation12], 64, 64, 4
    $region25: #{_forward_impl.1} parent=1 // pred_fallthru
      _
    // Predicated region
    $region26: #{_forward_impl.1} parent=1 // pred_check
      _
    $region27: #{_forward_impl.1} parent=1 // pred_check_branch
      %86 = sbr.rel (0) target = $region29
    $region28: #{_forward_impl.1} parent=1 // pred_region
      %s88 = ssub.s32 16, 16
      %89 = vsyncadd [#allocation12], %s88
      %s91 = sshll.u32 [#allocation13], 4
      %s92 = int_to_ptr.vmem [resolvable:$true] %s91
      %94 = dma.hbm_to_vmem [thread:$0]  %s6, 16, %s92, [#allocation12]
    $region29: #{_forward_impl.1} parent=1 // pred_fallthru
      _
    // Predicated region
    $region30: #{_forward_impl.1} parent=1 // pred_check
      _
    $region31: #{_forward_impl.1} parent=1 // pred_check_branch
      %96 = sbr.rel (0) target = $region33
    $region32: #{_forward_impl.1} parent=1 // pred_region
      %97 = dma.done [#allocation3], 256
    $region33: #{_forward_impl.1} parent=1 // pred_fallthru
      _
    // Predicated region
    $region34: #{_forward_impl.1} parent=1 // pred_check
      _
    $region35: #{_forward_impl.1} parent=1 // pred_check_branch
      %99 = sbr.rel (0) target = $region37
    $region36: #{_forward_impl.1} parent=1 // pred_region
      %100 = dma.done [#allocation6], 1024
    $region37: #{_forward_impl.1} parent=1 // pred_fallthru
      _
    // Predicated region
    $region38: #{_forward_impl.1} parent=1 // pred_check
      _
    $region39: #{_forward_impl.1} parent=1 // pred_check_branch
      %102 = sbr.rel (0) target = $region41
    $region40: #{_forward_impl.1} parent=1 // pred_region
      %103 = dma.done [#allocation6], 64
    $region41: #{_forward_impl.1} parent=1 // pred_fallthru
      _
    // Predicated region
    $region42: #{_forward_impl.1} parent=1 // pred_check
      _
    $region43: #{_forward_impl.1} parent=1 // pred_check_branch
      %105 = sbr.rel (0) target = $region45
    $region44: #{_forward_impl.1} parent=1 // pred_region
      %106 = dma.done [#allocation9], 16384
    $region45: #{_forward_impl.1} parent=1 // pred_fallthru
      _
    // Predicated region
    $region46: #{_forward_impl.1} parent=1 // pred_check
      _
    $region47: #{_forward_impl.1} parent=1 // pred_check_branch
      %108 = sbr.rel (0) target = $region49
    $region48: #{_forward_impl.1} parent=1 // pred_region
      %109 = dma.done [#allocation9], 64
    $region49: #{_forward_impl.1} parent=1 // pred_fallthru
      _
    // Predicated region
    $region50: #{_forward_impl.1} parent=1 // pred_check
      _
    $region51: #{_forward_impl.1} parent=1 // pred_check_branch
      %111 = sbr.rel (0) target = $region53
    $region52: #{_forward_impl.1} parent=1 // pred_region
      %112 = dma.done [#allocation12], 4096
    $region53: #{_forward_impl.1} parent=1 // pred_fallthru
      _
    // Predicated region
    $region54: #{_forward_impl.1} parent=1 // pred_check
      _
    $region55: #{_forward_impl.1} parent=1 // pred_check_branch
      %114 = sbr.rel (0) target = $region57
    $region56: #{_forward_impl.1} parent=1 // pred_region
      %115 = dma.done [#allocation12], 16
    $region57: #{_forward_impl.1} parent=1 // pred_fallthru
      _
    %v117 = vld [vmem:[#allocation2] sm:$0xff]
    %v118 = vld [vmem:[#allocation2 + $0x8] sm:$0xff]
    %v119 = vpack.c.bf16 %v118, %v117
    %v120 = vld [vmem:[#allocation5] sm:$0xff]
    %v121 = vld [vmem:[#allocation5 + $0x8] sm:$0xff]
    %v122 = vld [vmem:[#allocation5 + $0x10] sm:$0xff]
    %v123 = vld [vmem:[#allocation5 + $0x18] sm:$0xff]
    %v124 = vld [vmem:[#allocation5 + $0x20] sm:$0xff]
    %v125 = vld [vmem:[#allocation5 + $0x28] sm:$0xff]
    %v126 = vld [vmem:[#allocation5 + $0x30] sm:$0xff]
    %v127 = vld [vmem:[#allocation5 + $0x38] sm:$0xff]
    %v128 = vld [vmem:[#allocation7] sm:$0xf]
    %v130 = vlaneseq
    %v131 = vshrl.u32 %v130, 7
    %v132 = vsub.s32 0, %v131
    %v133 = vrot.slane %v128, %v132
    %v134 = vlaneseq
    %v135 = vshrl.u32 %v134, 7
    %v136 = vsub.s32 1, %v135
    %v137 = vrot.slane %v128, %v136
    %v138 = vlaneseq
    %v139 = vshrl.u32 %v138, 7
    %v140 = vsub.s32 2, %v139
    %v141 = vrot.slane %v128, %v140
    %v142 = vlaneseq
    %v143 = vshrl.u32 %v142, 7
    %v144 = vsub.s32 3, %v143
    %v145 = vrot.slane %v128, %v144
    %v158 = vunpack.c.l.b16 %v120
    %v159 = vunpack.c.h.b16 %v120
    %v160 = vunpack.c.l.b16 %v121
    %v161 = vunpack.c.h.b16 %v121
    %v162 = vunpack.c.l.b16 %v122
    %v163 = vunpack.c.h.b16 %v122
    %v164 = vunpack.c.l.b16 %v123
    %v165 = vunpack.c.h.b16 %v123
    %v166 = vunpack.c.l.b16 %v124
    %v167 = vunpack.c.h.b16 %v124
    %v168 = vunpack.c.l.b16 %v125
    %v169 = vunpack.c.h.b16 %v125
    %v170 = vunpack.c.l.b16 %v126
    %v171 = vunpack.c.h.b16 %v126
    %v172 = vunpack.c.l.b16 %v127
    %v173 = vunpack.c.h.b16 %v127
    %v174 = vpack.c.b16 %v162, %v158
    %v175 = vpack.c.b16 %v163, %v159
    %v176 = vpack.c.b16 %v164, %v160
    %v177 = vpack.c.b16 %v165, %v161
    %v178 = vpack.c.b16 %v170, %v166
    %v179 = vpack.c.b16 %v171, %v167
    %v180 = vpack.c.b16 %v172, %v168
    %v181 = vpack.c.b16 %v173, %v169
    %vm190 = vcmask 261120
    %v192 = vsel %vm190, %v119, 0
    %194 = vmatprep.subr.bf16.mxu0 %v175
    %195 = vmatpush1.bf16.msra.mxu0 %v174
    %196 = vmatprep.subr.bf16.mxu0 %v179
    %197 = vmatpush1.bf16.msra.mxu0 %v178
    %198 = vmatprep.subr.bf16.mxu0 0
    %199 = vmatpush1.bf16.msra.mxu0 0
    %200 = vmatprep.subr.bf16.mxu0 0
    %201 = vmatpush1.bf16.msra.mxu0 0
    %202 = vmatprep.subr.bf16.mxu0 0
    %203 = vmatpush1.bf16.msra.mxu0 0
    %204 = vmatprep.subr.bf16.mxu0 0
    %205 = vmatpush1.bf16.msra.mxu0 0
    %206 = vmatprep.subr.bf16.mxu0 0
    %207 = vmatpush1.bf16.msra.mxu0 0
    %208 = vmatprep.subr.bf16.mxu0 0
    %209 = vmatpush1.bf16.msra.mxu0 0
    %210 = vmatprep.subr.bf16.mxu0 0
    %211 = vmatpush1.bf16.msra.mxu0 0
    %212 = vmatprep.subr.bf16.mxu0 0
    %213 = vmatpush1.bf16.msra.mxu0 0
    %214 = vmatprep.subr.bf16.mxu0 0
    %215 = vmatpush1.bf16.msra.mxu0 0
    %216 = vmatprep.subr.bf16.mxu0 0
    %217 = vmatpush1.bf16.msra.mxu0 0
    %218 = vmatprep.subr.bf16.mxu0 0
    %219 = vmatpush1.bf16.msra.mxu0 0
    %220 = vmatprep.subr.bf16.mxu0 0
    %221 = vmatpush1.bf16.msra.mxu0 0
    %222 = vmatprep.subr.bf16.mxu0 0
    %223 = vmatpush1.bf16.msra.mxu0 0
    %224 = vmatprep.subr.bf16.mxu0 0
    %225 = vmatpush1.bf16.msra.mxu0 0
    %226 = vmatprep.mubr.bf16.mxu0 0
    %227 = vmatmul.mubr.bf16.gmra.mrb[0].mxu0 %v192
    %v228 = vpop.f32.mrb[0].mxu0
    %v229 = vadd.f32 %v133, %v228
    %v230 = vpop.f32.mrb[0].mxu0
    %v231 = vadd.f32 %v137, %v230
    %v232 = vpop.f32.mrb[0].mxu0
    %v233 = vadd.f32 %v133, %v232
    %v234 = vpop.f32.mrb[0].mxu0
    %v235 = vadd.f32 %v137, %v234
    %236 = vdwg.mxu0
    %237 = vmatprep.subr.bf16.mxu0 %v177
    %238 = vmatpush1.bf16.msra.mxu0 %v176
    %239 = vmatprep.subr.bf16.mxu0 %v181
    %240 = vmatpush1.bf16.msra.mxu0 %v180
    %241 = vmatprep.subr.bf16.mxu0 0
    %242 = vmatpush1.bf16.msra.mxu0 0
    %243 = vmatprep.subr.bf16.mxu0 0
    %244 = vmatpush1.bf16.msra.mxu0 0
    %245 = vmatprep.subr.bf16.mxu0 0
    %246 = vmatpush1.bf16.msra.mxu0 0
    %247 = vmatprep.subr.bf16.mxu0 0
    %248 = vmatpush1.bf16.msra.mxu0 0
    %249 = vmatprep.subr.bf16.mxu0 0
    %250 = vmatpush1.bf16.msra.mxu0 0
    %251 = vmatprep.subr.bf16.mxu0 0
    %252 = vmatpush1.bf16.msra.mxu0 0
    %253 = vmatprep.subr.bf16.mxu0 0
    %254 = vmatpush1.bf16.msra.mxu0 0
    %255 = vmatprep.subr.bf16.mxu0 0
    %256 = vmatpush1.bf16.msra.mxu0 0
    %257 = vmatprep.subr.bf16.mxu0 0
    %258 = vmatpush1.bf16.msra.mxu0 0
    %259 = vmatprep.subr.bf16.mxu0 0
    %260 = vmatpush1.bf16.msra.mxu0 0
    %261 = vmatprep.subr.bf16.mxu0 0
    %262 = vmatpush1.bf16.msra.mxu0 0
    %263 = vmatprep.subr.bf16.mxu0 0
    %264 = vmatpush1.bf16.msra.mxu0 0
    %265 = vmatprep.subr.bf16.mxu0 0
    %266 = vmatpush1.bf16.msra.mxu0 0
    %267 = vmatprep.subr.bf16.mxu0 0
    %268 = vmatpush1.bf16.msra.mxu0 0
    %269 = vmatprep.mubr.bf16.mxu0 0
    %270 = vmatmul.mubr.bf16.gmra.mrb[0].mxu0 %v192
    %v271 = vpop.f32.mrb[0].mxu0
    %v272 = vadd.f32 %v141, %v271
    %v273 = vpop.f32.mrb[0].mxu0
    %v274 = vadd.f32 %v145, %v273
    %v275 = vpop.f32.mrb[0].mxu0
    %v276 = vadd.f32 %v141, %v275
    %v277 = vpop.f32.mrb[0].mxu0
    %v278 = vadd.f32 %v145, %v277
    %279 = vdwg.mxu0
    %v280 = vmax.f32 %v229, 0.0
    %v281 = vmax.f32 %v231, 0.0
    %v282 = vmax.f32 %v272, 0.0
    %v283 = vmax.f32 %v274, 0.0
    %v284 = vmax.f32 %v233, 0.0
    %v285 = vmax.f32 %v235, 0.0
    %v286 = vmax.f32 %v276, 0.0
    %v287 = vmax.f32 %v278, 0.0
    %v288 = vpack.c.bf16 %v284, %v280
    %v289 = vpack.c.bf16 %v285, %v281
    %v290 = vpack.c.bf16 %v286, %v282
    %v291 = vpack.c.bf16 %v287, %v283
    %v292 = vld [vmem:[#allocation8] sm:$0xff]
    %v293 = vld [vmem:[#allocation8 + $0x8] sm:$0xff]
    %v294 = vld [vmem:[#allocation8 + $0x10] sm:$0xff]
    %v295 = vld [vmem:[#allocation8 + $0x18] sm:$0xff]
    %v296 = vld [vmem:[#allocation8 + $0x20] sm:$0xff]
    %v297 = vld [vmem:[#allocation8 + $0x28] sm:$0xff]
    %v298 = vld [vmem:[#allocation8 + $0x30] sm:$0xff]
    %v299 = vld [vmem:[#allocation8 + $0x38] sm:$0xff]
    %v300 = vld [vmem:[#allocation8 + $0x40] sm:$0xff]
    %v301 = vld [vmem:[#allocation8 + $0x48] sm:$0xff]
    %v302 = vld [vmem:[#allocation8 + $0x50] sm:$0xff]
    %v303 = vld [vmem:[#allocation8 + $0x58] sm:$0xff]
    %v304 = vld [vmem:[#allocation8 + $0x60] sm:$0xff]
    %v305 = vld [vmem:[#allocation8 + $0x68] sm:$0xff]
    %v306 = vld [vmem:[#allocation8 + $0x70] sm:$0xff]
    %v307 = vld [vmem:[#allocation8 + $0x78] sm:$0xff]
    %v308 = vld [vmem:[#allocation8 + $0x80] sm:$0xff]
    %v309 = vld [vmem:[#allocation8 + $0x88] sm:$0xff]
    %v310 = vld [vmem:[#allocation8 + $0x90] sm:$0xff]
    %v311 = vld [vmem:[#allocation8 + $0x98] sm:$0xff]
    %v312 = vld [vmem:[#allocation8 + $0xa0] sm:$0xff]
    %v313 = vld [vmem:[#allocation8 + $0xa8] sm:$0xff]
    %v314 = vld [vmem:[#allocation8 + $0xb0] sm:$0xff]
    %v315 = vld [vmem:[#allocation8 + $0xb8] sm:$0xff]
    %v316 = vld [vmem:[#allocation8 + $0xc0] sm:$0xff]
    %v317 = vld [vmem:[#allocation8 + $0xc8] sm:$0xff]
    %v318 = vld [vmem:[#allocation8 + $0xd0] sm:$0xff]
    %v319 = vld [vmem:[#allocation8 + $0xd8] sm:$0xff]
    %v320 = vld [vmem:[#allocation8 + $0xe0] sm:$0xff]
    %v321 = vld [vmem:[#allocation8 + $0xe8] sm:$0xff]
    %v322 = vld [vmem:[#allocation8 + $0xf0] sm:$0xff]
    %v323 = vld [vmem:[#allocation8 + $0xf8] sm:$0xff]
    %v324 = vld [vmem:[#allocation8 + $0x100] sm:$0xff]
    %v325 = vld [vmem:[#allocation8 + $0x108] sm:$0xff]
    %v326 = vld [vmem:[#allocation8 + $0x110] sm:$0xff]
    %v327 = vld [vmem:[#allocation8 + $0x118] sm:$0xff]
    %v328 = vld [vmem:[#allocation8 + $0x120] sm:$0xff]
    %v329 = vld [vmem:[#allocation8 + $0x128] sm:$0xff]
    %v330 = vld [vmem:[#allocation8 + $0x130] sm:$0xff]
    %v331 = vld [vmem:[#allocation8 + $0x138] sm:$0xff]
    %v332 = vld [vmem:[#allocation8 + $0x140] sm:$0xff]
    %v333 = vld [vmem:[#allocation8 + $0x148] sm:$0xff]
    %v334 = vld [vmem:[#allocation8 + $0x150] sm:$0xff]
    %v335 = vld [vmem:[#allocation8 + $0x158] sm:$0xff]
    %v336 = vld [vmem:[#allocation8 + $0x160] sm:$0xff]
    %v337 = vld [vmem:[#allocation8 + $0x168] sm:$0xff]
    %v338 = vld [vmem:[#allocation8 + $0x170] sm:$0xff]
    %v339 = vld [vmem:[#allocation8 + $0x178] sm:$0xff]
    %v340 = vld [vmem:[#allocation8 + $0x180] sm:$0xff]
    %v341 = vld [vmem:[#allocation8 + $0x188] sm:$0xff]
    %v342 = vld [vmem:[#allocation8 + $0x190] sm:$0xff]
    %v343 = vld [vmem:[#allocation8 + $0x198] sm:$0xff]
    %v344 = vld [vmem:[#allocation8 + $0x1a0] sm:$0xff]
    %v345 = vld [vmem:[#allocation8 + $0x1a8] sm:$0xff]
    %v346 = vld [vmem:[#allocation8 + $0x1b0] sm:$0xff]
    %v347 = vld [vmem:[#allocation8 + $0x1b8] sm:$0xff]
    %v348 = vld [vmem:[#allocation8 + $0x1c0] sm:$0xff]
    %v349 = vld [vmem:[#allocation8 + $0x1c8] sm:$0xff]
    %v350 = vld [vmem:[#allocation8 + $0x1d0] sm:$0xff]
    %v351 = vld [vmem:[#allocation8 + $0x1d8] sm:$0xff]
    %v352 = vld [vmem:[#allocation8 + $0x1e0] sm:$0xff]
    %v353 = vld [vmem:[#allocation8 + $0x1e8] sm:$0xff]
    %v354 = vld [vmem:[#allocation8 + $0x1f0] sm:$0xff]
    %v355 = vld [vmem:[#allocation8 + $0x1f8] sm:$0xff]
    %v356 = vld [vmem:[#allocation8 + $0x200] sm:$0xff]
    %v357 = vld [vmem:[#allocation8 + $0x208] sm:$0xff]
    %v358 = vld [vmem:[#allocation8 + $0x210] sm:$0xff]
    %v359 = vld [vmem:[#allocation8 + $0x218] sm:$0xff]
    %v360 = vld [vmem:[#allocation8 + $0x220] sm:$0xff]
    %v361 = vld [vmem:[#allocation8 + $0x228] sm:$0xff]
    %v362 = vld [vmem:[#allocation8 + $0x230] sm:$0xff]
    %v363 = vld [vmem:[#allocation8 + $0x238] sm:$0xff]
    %v364 = vld [vmem:[#allocation8 + $0x240] sm:$0xff]
    %v365 = vld [vmem:[#allocation8 + $0x248] sm:$0xff]
    %v366 = vld [vmem:[#allocation8 + $0x250] sm:$0xff]
    %v367 = vld [vmem:[#allocation8 + $0x258] sm:$0xff]
    %v368 = vld [vmem:[#allocation8 + $0x260] sm:$0xff]
    %v369 = vld [vmem:[#allocation8 + $0x268] sm:$0xff]
    %v370 = vld [vmem:[#allocation8 + $0x270] sm:$0xff]
    %v371 = vld [vmem:[#allocation8 + $0x278] sm:$0xff]
    %v372 = vld [vmem:[#allocation8 + $0x280] sm:$0xff]
    %v373 = vld [vmem:[#allocation8 + $0x288] sm:$0xff]
    %v374 = vld [vmem:[#allocation8 + $0x290] sm:$0xff]
    %v375 = vld [vmem:[#allocation8 + $0x298] sm:$0xff]
    %v376 = vld [vmem:[#allocation8 + $0x2a0] sm:$0xff]
    %v377 = vld [vmem:[#allocation8 + $0x2a8] sm:$0xff]
    %v378 = vld [vmem:[#allocation8 + $0x2b0] sm:$0xff]
    %v379 = vld [vmem:[#allocation8 + $0x2b8] sm:$0xff]
    %v380 = vld [vmem:[#allocation8 + $0x2c0] sm:$0xff]
    %v381 = vld [vmem:[#allocation8 + $0x2c8] sm:$0xff]
    %v382 = vld [vmem:[#allocation8 + $0x2d0] sm:$0xff]
    %v383 = vld [vmem:[#allocation8 + $0x2d8] sm:$0xff]
    %v384 = vld [vmem:[#allocation8 + $0x2e0] sm:$0xff]
    %v385 = vld [vmem:[#allocation8 + $0x2e8] sm:$0xff]
    %v386 = vld [vmem:[#allocation8 + $0x2f0] sm:$0xff]
    %v387 = vld [vmem:[#allocation8 + $0x2f8] sm:$0xff]
    %v388 = vld [vmem:[#allocation8 + $0x300] sm:$0xff]
    %v389 = vld [vmem:[#allocation8 + $0x308] sm:$0xff]
    %v390 = vld [vmem:[#allocation8 + $0x310] sm:$0xff]
    %v391 = vld [vmem:[#allocation8 + $0x318] sm:$0xff]
    %v392 = vld [vmem:[#allocation8 + $0x320] sm:$0xff]
    %v393 = vld [vmem:[#allocation8 + $0x328] sm:$0xff]
    %v394 = vld [vmem:[#allocation8 + $0x330] sm:$0xff]
    %v395 = vld [vmem:[#allocation8 + $0x338] sm:$0xff]
    %v396 = vld [vmem:[#allocation8 + $0x340] sm:$0xff]
    %v397 = vld [vmem:[#allocation8 + $0x348] sm:$0xff]
    %v398 = vld [vmem:[#allocation8 + $0x350] sm:$0xff]
    %v399 = vld [vmem:[#allocation8 + $0x358] sm:$0xff]
    %v400 = vld [vmem:[#allocation8 + $0x360] sm:$0xff]
    %v401 = vld [vmem:[#allocation8 + $0x368] sm:$0xff]
    %v402 = vld [vmem:[#allocation8 + $0x370] sm:$0xff]
    %v403 = vld [vmem:[#allocation8 + $0x378] sm:$0xff]
    %v404 = vld [vmem:[#allocation8 + $0x380] sm:$0xff]
    %v405 = vld [vmem:[#allocation8 + $0x388] sm:$0xff]
    %v406 = vld [vmem:[#allocation8 + $0x390] sm:$0xff]
    %v407 = vld [vmem:[#allocation8 + $0x398] sm:$0xff]
    %v408 = vld [vmem:[#allocation8 + $0x3a0] sm:$0xff]
    %v409 = vld [vmem:[#allocation8 + $0x3a8] sm:$0xff]
    %v410 = vld [vmem:[#allocation8 + $0x3b0] sm:$0xff]
    %v411 = vld [vmem:[#allocation8 + $0x3b8] sm:$0xff]
    %v412 = vld [vmem:[#allocation8 + $0x3c0] sm:$0xff]
    %v413 = vld [vmem:[#allocation8 + $0x3c8] sm:$0xff]
    %v414 = vld [vmem:[#allocation8 + $0x3d0] sm:$0xff]
    %v415 = vld [vmem:[#allocation8 + $0x3d8] sm:$0xff]
    %v416 = vld [vmem:[#allocation8 + $0x3e0] sm:$0xff]
    %v417 = vld [vmem:[#allocation8 + $0x3e8] sm:$0xff]
    %v418 = vld [vmem:[#allocation8 + $0x3f0] sm:$0xff]
    %v419 = vld [vmem:[#allocation8 + $0x3f8] sm:$0xff]
    %v420 = vld [vmem:[#allocation10] sm:$0xf]
    %v422 = vlaneseq
    %v423 = vshrl.u32 %v422, 7
    %v424 = vsub.s32 0, %v423
    %v425 = vrot.slane %v420, %v424
    %v426 = vlaneseq
    %v427 = vshrl.u32 %v426, 7
    %v428 = vsub.s32 1, %v427
    %v429 = vrot.slane %v420, %v428
    %v430 = vlaneseq
    %v431 = vshrl.u32 %v430, 7
    %v432 = vsub.s32 2, %v431
    %v433 = vrot.slane %v420, %v432
    %v434 = vlaneseq
    %v435 = vshrl.u32 %v434, 7
    %v436 = vsub.s32 3, %v435
    %v437 = vrot.slane %v420, %v436
    %v570 = vunpack.c.l.b16 %v292
    %v571 = vunpack.c.h.b16 %v292
    %v572 = vunpack.c.l.b16 %v293
    %v573 = vunpack.c.h.b16 %v293
    %v574 = vunpack.c.l.b16 %v294
    %v575 = vunpack.c.h.b16 %v294
    %v576 = vunpack.c.l.b16 %v295
    %v577 = vunpack.c.h.b16 %v295
    %v578 = vunpack.c.l.b16 %v296
    %v579 = vunpack.c.h.b16 %v296
    %v580 = vunpack.c.l.b16 %v297
    %v581 = vunpack.c.h.b16 %v297
    %v582 = vunpack.c.l.b16 %v298
    %v583 = vunpack.c.h.b16 %v298
    %v584 = vunpack.c.l.b16 %v299
    %v585 = vunpack.c.h.b16 %v299
    %v586 = vunpack.c.l.b16 %v300
    %v587 = vunpack.c.h.b16 %v300
    %v588 = vunpack.c.l.b16 %v301
    %v589 = vunpack.c.h.b16 %v301
    %v590 = vunpack.c.l.b16 %v302
    %v591 = vunpack.c.h.b16 %v302
    %v592 = vunpack.c.l.b16 %v303
    %v593 = vunpack.c.h.b16 %v303
    %v594 = vunpack.c.l.b16 %v304
    %v595 = vunpack.c.h.b16 %v304
    %v596 = vunpack.c.l.b16 %v305
    %v597 = vunpack.c.h.b16 %v305
    %v598 = vunpack.c.l.b16 %v306
    %v599 = vunpack.c.h.b16 %v306
    %v600 = vunpack.c.l.b16 %v307
    %v601 = vunpack.c.h.b16 %v307
    %v602 = vunpack.c.l.b16 %v308
    %v603 = vunpack.c.h.b16 %v308
    %v604 = vunpack.c.l.b16 %v309
    %v605 = vunpack.c.h.b16 %v309
    %v606 = vunpack.c.l.b16 %v310
    %v607 = vunpack.c.h.b16 %v310
    %v608 = vunpack.c.l.b16 %v311
    %v609 = vunpack.c.h.b16 %v311
    %v610 = vunpack.c.l.b16 %v312
    %v611 = vunpack.c.h.b16 %v312
    %v612 = vunpack.c.l.b16 %v313
    %v613 = vunpack.c.h.b16 %v313
    %v614 = vunpack.c.l.b16 %v314
    %v615 = vunpack.c.h.b16 %v314
    %v616 = vunpack.c.l.b16 %v315
    %v617 = vunpack.c.h.b16 %v315
    %v618 = vunpack.c.l.b16 %v316
    %v619 = vunpack.c.h.b16 %v316
    %v620 = vunpack.c.l.b16 %v317
    %v621 = vunpack.c.h.b16 %v317
    %v622 = vunpack.c.l.b16 %v318
    %v623 = vunpack.c.h.b16 %v318
    %v624 = vunpack.c.l.b16 %v319
    %v625 = vunpack.c.h.b16 %v319
    %v626 = vunpack.c.l.b16 %v320
    %v627 = vunpack.c.h.b16 %v320
    %v628 = vunpack.c.l.b16 %v321
    %v629 = vunpack.c.h.b16 %v321
    %v630 = vunpack.c.l.b16 %v322
    %v631 = vunpack.c.h.b16 %v322
    %v632 = vunpack.c.l.b16 %v323
    %v633 = vunpack.c.h.b16 %v323
    %v634 = vunpack.c.l.b16 %v324
    %v635 = vunpack.c.h.b16 %v324
    %v636 = vunpack.c.l.b16 %v325
    %v637 = vunpack.c.h.b16 %v325
    %v638 = vunpack.c.l.b16 %v326
    %v639 = vunpack.c.h.b16 %v326
    %v640 = vunpack.c.l.b16 %v327
    %v641 = vunpack.c.h.b16 %v327
    %v642 = vunpack.c.l.b16 %v328
    %v643 = vunpack.c.h.b16 %v328
    %v644 = vunpack.c.l.b16 %v329
    %v645 = vunpack.c.h.b16 %v329
    %v646 = vunpack.c.l.b16 %v330
    %v647 = vunpack.c.h.b16 %v330
    %v648 = vunpack.c.l.b16 %v331
    %v649 = vunpack.c.h.b16 %v331
    %v650 = vunpack.c.l.b16 %v332
    %v651 = vunpack.c.h.b16 %v332
    %v652 = vunpack.c.l.b16 %v333
    %v653 = vunpack.c.h.b16 %v333
    %v654 = vunpack.c.l.b16 %v334
    %v655 = vunpack.c.h.b16 %v334
    %v656 = vunpack.c.l.b16 %v335
    %v657 = vunpack.c.h.b16 %v335
    %v658 = vunpack.c.l.b16 %v336
    %v659 = vunpack.c.h.b16 %v336
    %v660 = vunpack.c.l.b16 %v337
    %v661 = vunpack.c.h.b16 %v337
    %v662 = vunpack.c.l.b16 %v338
    %v663 = vunpack.c.h.b16 %v338
    %v664 = vunpack.c.l.b16 %v339
    %v665 = vunpack.c.h.b16 %v339
    %v666 = vunpack.c.l.b16 %v340
    %v667 = vunpack.c.h.b16 %v340
    %v668 = vunpack.c.l.b16 %v341
    %v669 = vunpack.c.h.b16 %v341
    %v670 = vunpack.c.l.b16 %v342
    %v671 = vunpack.c.h.b16 %v342
    %v672 = vunpack.c.l.b16 %v343
    %v673 = vunpack.c.h.b16 %v343
    %v674 = vunpack.c.l.b16 %v344
    %v675 = vunpack.c.h.b16 %v344
    %v676 = vunpack.c.l.b16 %v345
    %v677 = vunpack.c.h.b16 %v345
    %v678 = vunpack.c.l.b16 %v346
    %v679 = vunpack.c.h.b16 %v346
    %v680 = vunpack.c.l.b16 %v347
    %v681 = vunpack.c.h.b16 %v347
    %v682 = vunpack.c.l.b16 %v348
    %v683 = vunpack.c.h.b16 %v348
    %v684 = vunpack.c.l.b16 %v349
    %v685 = vunpack.c.h.b16 %v349
    %v686 = vunpack.c.l.b16 %v350
    %v687 = vunpack.c.h.b16 %v350
    %v688 = vunpack.c.l.b16 %v351
    %v689 = vunpack.c.h.b16 %v351
    %v690 = vunpack.c.l.b16 %v352
    %v691 = vunpack.c.h.b16 %v352
    %v692 = vunpack.c.l.b16 %v353
    %v693 = vunpack.c.h.b16 %v353
    %v694 = vunpack.c.l.b16 %v354
    %v695 = vunpack.c.h.b16 %v354
    %v696 = vunpack.c.l.b16 %v355
    %v697 = vunpack.c.h.b16 %v355
    %v698 = vunpack.c.l.b16 %v356
    %v699 = vunpack.c.h.b16 %v356
    %v700 = vunpack.c.l.b16 %v357
    %v701 = vunpack.c.h.b16 %v357
    %v702 = vunpack.c.l.b16 %v358
    %v703 = vunpack.c.h.b16 %v358
    %v704 = vunpack.c.l.b16 %v359
    %v705 = vunpack.c.h.b16 %v359
    %v706 = vunpack.c.l.b16 %v360
    %v707 = vunpack.c.h.b16 %v360
    %v708 = vunpack.c.l.b16 %v361
    %v709 = vunpack.c.h.b16 %v361
    %v710 = vunpack.c.l.b16 %v362
    %v711 = vunpack.c.h.b16 %v362
    %v712 = vunpack.c.l.b16 %v363
    %v713 = vunpack.c.h.b16 %v363
    %v714 = vunpack.c.l.b16 %v364
    %v715 = vunpack.c.h.b16 %v364
    %v716 = vunpack.c.l.b16 %v365
    %v717 = vunpack.c.h.b16 %v365
    %v718 = vunpack.c.l.b16 %v366
    %v719 = vunpack.c.h.b16 %v366
    %v720 = vunpack.c.l.b16 %v367
    %v721 = vunpack.c.h.b16 %v367
    %v722 = vunpack.c.l.b16 %v368
    %v723 = vunpack.c.h.b16 %v368
    %v724 = vunpack.c.l.b16 %v369
    %v725 = vunpack.c.h.b16 %v369
    %v726 = vunpack.c.l.b16 %v370
    %v727 = vunpack.c.h.b16 %v370
    %v728 = vunpack.c.l.b16 %v371
    %v729 = vunpack.c.h.b16 %v371
    %v730 = vunpack.c.l.b16 %v372
    %v731 = vunpack.c.h.b16 %v372
    %v732 = vunpack.c.l.b16 %v373
    %v733 = vunpack.c.h.b16 %v373
    %v734 = vunpack.c.l.b16 %v374
    %v735 = vunpack.c.h.b16 %v374
    %v736 = vunpack.c.l.b16 %v375
    %v737 = vunpack.c.h.b16 %v375
    %v738 = vunpack.c.l.b16 %v376
    %v739 = vunpack.c.h.b16 %v376
    %v740 = vunpack.c.l.b16 %v377
    %v741 = vunpack.c.h.b16 %v377
    %v742 = vunpack.c.l.b16 %v378
    %v743 = vunpack.c.h.b16 %v378
    %v744 = vunpack.c.l.b16 %v379
    %v745 = vunpack.c.h.b16 %v379
    %v746 = vunpack.c.l.b16 %v380
    %v747 = vunpack.c.h.b16 %v380
    %v748 = vunpack.c.l.b16 %v381
    %v749 = vunpack.c.h.b16 %v381
    %v750 = vunpack.c.l.b16 %v382
    %v751 = vunpack.c.h.b16 %v382
    %v752 = vunpack.c.l.b16 %v383
    %v753 = vunpack.c.h.b16 %v383
    %v754 = vunpack.c.l.b16 %v384
    %v755 = vunpack.c.h.b16 %v384
    %v756 = vunpack.c.l.b16 %v385
    %v757 = vunpack.c.h.b16 %v385
    %v758 = vunpack.c.l.b16 %v386
    %v759 = vunpack.c.h.b16 %v386
    %v760 = vunpack.c.l.b16 %v387
    %v761 = vunpack.c.h.b16 %v387
    %v762 = vunpack.c.l.b16 %v388
    %v763 = vunpack.c.h.b16 %v388
    %v764 = vunpack.c.l.b16 %v389
    %v765 = vunpack.c.h.b16 %v389
    %v766 = vunpack.c.l.b16 %v390
    %v767 = vunpack.c.h.b16 %v390
    %v768 = vunpack.c.l.b16 %v391
    %v769 = vunpack.c.h.b16 %v391
    %v770 = vunpack.c.l.b16 %v392
    %v771 = vunpack.c.h.b16 %v392
    %v772 = vunpack.c.l.b16 %v393
    %v773 = vunpack.c.h.b16 %v393
    %v774 = vunpack.c.l.b16 %v394
    %v775 = vunpack.c.h.b16 %v394
    %v776 = vunpack.c.l.b16 %v395
    %v777 = vunpack.c.h.b16 %v395
    %v778 = vunpack.c.l.b16 %v396
    %v779 = vunpack.c.h.b16 %v396
    %v780 = vunpack.c.l.b16 %v397
    %v781 = vunpack.c.h.b16 %v397
    %v782 = vunpack.c.l.b16 %v398
    %v783 = vunpack.c.h.b16 %v398
    %v784 = vunpack.c.l.b16 %v399
    %v785 = vunpack.c.h.b16 %v399
    %v786 = vunpack.c.l.b16 %v400
    %v787 = vunpack.c.h.b16 %v400
    %v788 = vunpack.c.l.b16 %v401
    %v789 = vunpack.c.h.b16 %v401
    %v790 = vunpack.c.l.b16 %v402
    %v791 = vunpack.c.h.b16 %v402
    %v792 = vunpack.c.l.b16 %v403
    %v793 = vunpack.c.h.b16 %v403
    %v794 = vunpack.c.l.b16 %v404
    %v795 = vunpack.c.h.b16 %v404
    %v796 = vunpack.c.l.b16 %v405
    %v797 = vunpack.c.h.b16 %v405
    %v798 = vunpack.c.l.b16 %v406
    %v799 = vunpack.c.h.b16 %v406
    %v800 = vunpack.c.l.b16 %v407
    %v801 = vunpack.c.h.b16 %v407
    %v802 = vunpack.c.l.b16 %v408
    %v803 = vunpack.c.h.b16 %v408
    %v804 = vunpack.c.l.b16 %v409
    %v805 = vunpack.c.h.b16 %v409
    %v806 = vunpack.c.l.b16 %v410
    %v807 = vunpack.c.h.b16 %v410
    %v808 = vunpack.c.l.b16 %v411
    %v809 = vunpack.c.h.b16 %v411
    %v810 = vunpack.c.l.b16 %v412
    %v811 = vunpack.c.h.b16 %v412
    %v812 = vunpack.c.l.b16 %v413
    %v813 = vunpack.c.h.b16 %v413
    %v814 = vunpack.c.l.b16 %v414
    %v815 = vunpack.c.h.b16 %v414
    %v816 = vunpack.c.l.b16 %v415
    %v817 = vunpack.c.h.b16 %v415
    %v818 = vunpack.c.l.b16 %v416
    %v819 = vunpack.c.h.b16 %v416
    %v820 = vunpack.c.l.b16 %v417
    %v821 = vunpack.c.h.b16 %v417
    %v822 = vunpack.c.l.b16 %v418
    %v823 = vunpack.c.h.b16 %v418
    %v824 = vunpack.c.l.b16 %v419
    %v825 = vunpack.c.h.b16 %v419
    %v826 = vpack.c.b16 %v574, %v570
    %v827 = vpack.c.b16 %v575, %v571
    %v828 = vpack.c.b16 %v576, %v572
    %v829 = vpack.c.b16 %v577, %v573
    %v830 = vpack.c.b16 %v582, %v578
    %v831 = vpack.c.b16 %v583, %v579
    %v832 = vpack.c.b16 %v584, %v580
    %v833 = vpack.c.b16 %v585, %v581
    %v834 = vpack.c.b16 %v590, %v586
    %v835 = vpack.c.b16 %v591, %v587
    %v836 = vpack.c.b16 %v592, %v588
    %v837 = vpack.c.b16 %v593, %v589
    %v838 = vpack.c.b16 %v598, %v594
    %v839 = vpack.c.b16 %v599, %v595
    %v840 = vpack.c.b16 %v600, %v596
    %v841 = vpack.c.b16 %v601, %v597
    %v842 = vpack.c.b16 %v606, %v602
    %v843 = vpack.c.b16 %v607, %v603
    %v844 = vpack.c.b16 %v608, %v604
    %v845 = vpack.c.b16 %v609, %v605
    %v846 = vpack.c.b16 %v614, %v610
    %v847 = vpack.c.b16 %v615, %v611
    %v848 = vpack.c.b16 %v616, %v612
    %v849 = vpack.c.b16 %v617, %v613
    %v850 = vpack.c.b16 %v622, %v618
    %v851 = vpack.c.b16 %v623, %v619
    %v852 = vpack.c.b16 %v624, %v620
    %v853 = vpack.c.b16 %v625, %v621
    %v854 = vpack.c.b16 %v630, %v626
    %v855 = vpack.c.b16 %v631, %v627
    %v856 = vpack.c.b16 %v632, %v628
    %v857 = vpack.c.b16 %v633, %v629
    %v858 = vpack.c.b16 %v638, %v634
    %v859 = vpack.c.b16 %v639, %v635
    %v860 = vpack.c.b16 %v640, %v636
    %v861 = vpack.c.b16 %v641, %v637
    %v862 = vpack.c.b16 %v646, %v642
    %v863 = vpack.c.b16 %v647, %v643
    %v864 = vpack.c.b16 %v648, %v644
    %v865 = vpack.c.b16 %v649, %v645
    %v866 = vpack.c.b16 %v654, %v650
    %v867 = vpack.c.b16 %v655, %v651
    %v868 = vpack.c.b16 %v656, %v652
    %v869 = vpack.c.b16 %v657, %v653
    %v870 = vpack.c.b16 %v662, %v658
    %v871 = vpack.c.b16 %v663, %v659
    %v872 = vpack.c.b16 %v664, %v660
    %v873 = vpack.c.b16 %v665, %v661
    %v874 = vpack.c.b16 %v670, %v666
    %v875 = vpack.c.b16 %v671, %v667
    %v876 = vpack.c.b16 %v672, %v668
    %v877 = vpack.c.b16 %v673, %v669
    %v878 = vpack.c.b16 %v678, %v674
    %v879 = vpack.c.b16 %v679, %v675
    %v880 = vpack.c.b16 %v680, %v676
    %v881 = vpack.c.b16 %v681, %v677
    %v882 = vpack.c.b16 %v686, %v682
    %v883 = vpack.c.b16 %v687, %v683
    %v884 = vpack.c.b16 %v688, %v684
    %v885 = vpack.c.b16 %v689, %v685
    %v886 = vpack.c.b16 %v694, %v690
    %v887 = vpack.c.b16 %v695, %v691
    %v888 = vpack.c.b16 %v696, %v692
    %v889 = vpack.c.b16 %v697, %v693
    %v890 = vpack.c.b16 %v702, %v698
    %v891 = vpack.c.b16 %v703, %v699
    %v892 = vpack.c.b16 %v704, %v700
    %v893 = vpack.c.b16 %v705, %v701
    %v894 = vpack.c.b16 %v710, %v706
    %v895 = vpack.c.b16 %v711, %v707
    %v896 = vpack.c.b16 %v712, %v708
    %v897 = vpack.c.b16 %v713, %v709
    %v898 = vpack.c.b16 %v718, %v714
    %v899 = vpack.c.b16 %v719, %v715
    %v900 = vpack.c.b16 %v720, %v716
    %v901 = vpack.c.b16 %v721, %v717
    %v902 = vpack.c.b16 %v726, %v722
    %v903 = vpack.c.b16 %v727, %v723
    %v904 = vpack.c.b16 %v728, %v724
    %v905 = vpack.c.b16 %v729, %v725
    %v906 = vpack.c.b16 %v734, %v730
    %v907 = vpack.c.b16 %v735, %v731
    %v908 = vpack.c.b16 %v736, %v732
    %v909 = vpack.c.b16 %v737, %v733
    %v910 = vpack.c.b16 %v742, %v738
    %v911 = vpack.c.b16 %v743, %v739
    %v912 = vpack.c.b16 %v744, %v740
    %v913 = vpack.c.b16 %v745, %v741
    %v914 = vpack.c.b16 %v750, %v746
    %v915 = vpack.c.b16 %v751, %v747
    %v916 = vpack.c.b16 %v752, %v748
    %v917 = vpack.c.b16 %v753, %v749
    %v918 = vpack.c.b16 %v758, %v754
    %v919 = vpack.c.b16 %v759, %v755
    %v920 = vpack.c.b16 %v760, %v756
    %v921 = vpack.c.b16 %v761, %v757
    %v922 = vpack.c.b16 %v766, %v762
    %v923 = vpack.c.b16 %v767, %v763
    %v924 = vpack.c.b16 %v768, %v764
    %v925 = vpack.c.b16 %v769, %v765
    %v926 = vpack.c.b16 %v774, %v770
    %v927 = vpack.c.b16 %v775, %v771
    %v928 = vpack.c.b16 %v776, %v772
    %v929 = vpack.c.b16 %v777, %v773
    %v930 = vpack.c.b16 %v782, %v778
    %v931 = vpack.c.b16 %v783, %v779
    %v932 = vpack.c.b16 %v784, %v780
    %v933 = vpack.c.b16 %v785, %v781
    %v934 = vpack.c.b16 %v790, %v786
    %v935 = vpack.c.b16 %v791, %v787
    %v936 = vpack.c.b16 %v792, %v788
    %v937 = vpack.c.b16 %v793, %v789
    %v938 = vpack.c.b16 %v798, %v794
    %v939 = vpack.c.b16 %v799, %v795
    %v940 = vpack.c.b16 %v800, %v796
    %v941 = vpack.c.b16 %v801, %v797
    %v942 = vpack.c.b16 %v806, %v802
    %v943 = vpack.c.b16 %v807, %v803
    %v944 = vpack.c.b16 %v808, %v804
    %v945 = vpack.c.b16 %v809, %v805
    %v946 = vpack.c.b16 %v814, %v810
    %v947 = vpack.c.b16 %v815, %v811
    %v948 = vpack.c.b16 %v816, %v812
    %v949 = vpack.c.b16 %v817, %v813
    %v950 = vpack.c.b16 %v822, %v818
    %v951 = vpack.c.b16 %v823, %v819
    %v952 = vpack.c.b16 %v824, %v820
    %v953 = vpack.c.b16 %v825, %v821
    %1082 = vmatprep.subr.bf16.mxu0 %v827
    %1083 = vmatpush1.bf16.msra.mxu0 %v826
    %1084 = vmatprep.subr.bf16.mxu0 %v831
    %1085 = vmatpush1.bf16.msra.mxu0 %v830
    %1086 = vmatprep.subr.bf16.mxu0 %v835
    %1087 = vmatpush1.bf16.msra.mxu0 %v834
    %1088 = vmatprep.subr.bf16.mxu0 %v839
    %1089 = vmatpush1.bf16.msra.mxu0 %v838
    %1090 = vmatprep.subr.bf16.mxu0 %v843
    %1091 = vmatpush1.bf16.msra.mxu0 %v842
    %1092 = vmatprep.subr.bf16.mxu0 %v847
    %1093 = vmatpush1.bf16.msra.mxu0 %v846
    %1094 = vmatprep.subr.bf16.mxu0 %v851
    %1095 = vmatpush1.bf16.msra.mxu0 %v850
    %1096 = vmatprep.subr.bf16.mxu0 %v855
    %1097 = vmatpush1.bf16.msra.mxu0 %v854
    %1098 = vmatprep.subr.bf16.mxu0 %v859
    %1099 = vmatpush1.bf16.msra.mxu0 %v858
    %1100 = vmatprep.subr.bf16.mxu0 %v863
    %1101 = vmatpush1.bf16.msra.mxu0 %v862
    %1102 = vmatprep.subr.bf16.mxu0 %v867
    %1103 = vmatpush1.bf16.msra.mxu0 %v866
    %1104 = vmatprep.subr.bf16.mxu0 %v871
    %1105 = vmatpush1.bf16.msra.mxu0 %v870
    %1106 = vmatprep.subr.bf16.mxu0 %v875
    %1107 = vmatpush1.bf16.msra.mxu0 %v874
    %1108 = vmatprep.subr.bf16.mxu0 %v879
    %1109 = vmatpush1.bf16.msra.mxu0 %v878
    %1110 = vmatprep.subr.bf16.mxu0 %v883
    %1111 = vmatpush1.bf16.msra.mxu0 %v882
    %1112 = vmatprep.subr.bf16.mxu0 %v887
    %1113 = vmatpush1.bf16.msra.mxu0 %v886
    %1114 = vmatprep.mubr.bf16.mxu0 %v289
    %1115 = vmatmul.mubr.bf16.gmra.mrb[0].mxu0 %v288
    %v1116 = vpop.f32.mrb[0].mxu0
    %v1117 = vadd.f32 %v425, %v1116
    %v1118 = vpop.f32.mrb[0].mxu0
    %v1119 = vadd.f32 %v429, %v1118
    %v1120 = vpop.f32.mrb[0].mxu0
    %v1121 = vadd.f32 %v425, %v1120
    %v1122 = vpop.f32.mrb[0].mxu0
    %v1123 = vadd.f32 %v429, %v1122
    %1124 = vdwg.mxu0
    %1125 = vmatprep.subr.bf16.mxu0 %v891
    %1126 = vmatpush1.bf16.msra.mxu0 %v890
    %1127 = vmatprep.subr.bf16.mxu0 %v895
    %1128 = vmatpush1.bf16.msra.mxu0 %v894
    %1129 = vmatprep.subr.bf16.mxu0 %v899
    %1130 = vmatpush1.bf16.msra.mxu0 %v898
    %1131 = vmatprep.subr.bf16.mxu0 %v903
    %1132 = vmatpush1.bf16.msra.mxu0 %v902
    %1133 = vmatprep.subr.bf16.mxu0 %v907
    %1134 = vmatpush1.bf16.msra.mxu0 %v906
    %1135 = vmatprep.subr.bf16.mxu0 %v911
    %1136 = vmatpush1.bf16.msra.mxu0 %v910
    %1137 = vmatprep.subr.bf16.mxu0 %v915
    %1138 = vmatpush1.bf16.msra.mxu0 %v914
    %1139 = vmatprep.subr.bf16.mxu0 %v919
    %1140 = vmatpush1.bf16.msra.mxu0 %v918
    %1141 = vmatprep.subr.bf16.mxu0 %v923
    %1142 = vmatpush1.bf16.msra.mxu0 %v922
    %1143 = vmatprep.subr.bf16.mxu0 %v927
    %1144 = vmatpush1.bf16.msra.mxu0 %v926
    %1145 = vmatprep.subr.bf16.mxu0 %v931
    %1146 = vmatpush1.bf16.msra.mxu0 %v930
    %1147 = vmatprep.subr.bf16.mxu0 %v935
    %1148 = vmatpush1.bf16.msra.mxu0 %v934
    %1149 = vmatprep.subr.bf16.mxu0 %v939
    %1150 = vmatpush1.bf16.msra.mxu0 %v938
    %1151 = vmatprep.subr.bf16.mxu0 %v943
    %1152 = vmatpush1.bf16.msra.mxu0 %v942
    %1153 = vmatprep.subr.bf16.mxu0 %v947
    %1154 = vmatpush1.bf16.msra.mxu0 %v946
    %1155 = vmatprep.subr.bf16.mxu0 %v951
    %1156 = vmatpush1.bf16.msra.mxu0 %v950
    %1157 = vmatprep.mubr.bf16.mxu0 %v291
    %1158 = vmatmul.mubr.bf16.gmra.mrb[0].mxu0 %v290
    %v1159 = vpop.f32.mrb[0].mxu0
    %v1160 = vadd.f32 %v1117, %v1159
    %v1161 = vpop.f32.mrb[0].mxu0
    %v1162 = vadd.f32 %v1119, %v1161
    %v1163 = vpop.f32.mrb[0].mxu0
    %v1164 = vadd.f32 %v1121, %v1163
    %v1165 = vpop.f32.mrb[0].mxu0
    %v1166 = vadd.f32 %v1123, %v1165
    %1167 = vdwg.mxu0
    %1168 = vmatprep.subr.bf16.mxu0 %v829
    %1169 = vmatpush1.bf16.msra.mxu0 %v828
    %1170 = vmatprep.subr.bf16.mxu0 %v833
    %1171 = vmatpush1.bf16.msra.mxu0 %v832
    %1172 = vmatprep.subr.bf16.mxu0 %v837
    %1173 = vmatpush1.bf16.msra.mxu0 %v836
    %1174 = vmatprep.subr.bf16.mxu0 %v841
    %1175 = vmatpush1.bf16.msra.mxu0 %v840
    %1176 = vmatprep.subr.bf16.mxu0 %v845
    %1177 = vmatpush1.bf16.msra.mxu0 %v844
    %1178 = vmatprep.subr.bf16.mxu0 %v849
    %1179 = vmatpush1.bf16.msra.mxu0 %v848
    %1180 = vmatprep.subr.bf16.mxu0 %v853
    %1181 = vmatpush1.bf16.msra.mxu0 %v852
    %1182 = vmatprep.subr.bf16.mxu0 %v857
    %1183 = vmatpush1.bf16.msra.mxu0 %v856
    %1184 = vmatprep.subr.bf16.mxu0 %v861
    %1185 = vmatpush1.bf16.msra.mxu0 %v860
    %1186 = vmatprep.subr.bf16.mxu0 %v865
    %1187 = vmatpush1.bf16.msra.mxu0 %v864
    %1188 = vmatprep.subr.bf16.mxu0 %v869
    %1189 = vmatpush1.bf16.msra.mxu0 %v868
    %1190 = vmatprep.subr.bf16.mxu0 %v873
    %1191 = vmatpush1.bf16.msra.mxu0 %v872
    %1192 = vmatprep.subr.bf16.mxu0 %v877
    %1193 = vmatpush1.bf16.msra.mxu0 %v876
    %1194 = vmatprep.subr.bf16.mxu0 %v881
    %1195 = vmatpush1.bf16.msra.mxu0 %v880
    %1196 = vmatprep.subr.bf16.mxu0 %v885
    %1197 = vmatpush1.bf16.msra.mxu0 %v884
    %1198 = vmatprep.subr.bf16.mxu0 %v889
    %1199 = vmatpush1.bf16.msra.mxu0 %v888
    %1200 = vmatprep.mubr.bf16.mxu0 %v289
    %1201 = vmatmul.mubr.bf16.gmra.mrb[0].mxu0 %v288
    %v1202 = vpop.f32.mrb[0].mxu0
    %v1203 = vadd.f32 %v433, %v1202
    %v1204 = vpop.f32.mrb[0].mxu0
    %v1205 = vadd.f32 %v437, %v1204
    %v1206 = vpop.f32.mrb[0].mxu0
    %v1207 = vadd.f32 %v433, %v1206
    %v1208 = vpop.f32.mrb[0].mxu0
    %v1209 = vadd.f32 %v437, %v1208
    %1210 = vdwg.mxu0
    %1211 = vmatprep.subr.bf16.mxu0 %v893
    %1212 = vmatpush1.bf16.msra.mxu0 %v892
    %1213 = vmatprep.subr.bf16.mxu0 %v897
    %1214 = vmatpush1.bf16.msra.mxu0 %v896
    %1215 = vmatprep.subr.bf16.mxu0 %v901
    %1216 = vmatpush1.bf16.msra.mxu0 %v900
    %1217 = vmatprep.subr.bf16.mxu0 %v905
    %1218 = vmatpush1.bf16.msra.mxu0 %v904
    %1219 = vmatprep.subr.bf16.mxu0 %v909
    %1220 = vmatpush1.bf16.msra.mxu0 %v908
    %1221 = vmatprep.subr.bf16.mxu0 %v913
    %1222 = vmatpush1.bf16.msra.mxu0 %v912
    %1223 = vmatprep.subr.bf16.mxu0 %v917
    %1224 = vmatpush1.bf16.msra.mxu0 %v916
    %1225 = vmatprep.subr.bf16.mxu0 %v921
    %1226 = vmatpush1.bf16.msra.mxu0 %v920
    %1227 = vmatprep.subr.bf16.mxu0 %v925
    %1228 = vmatpush1.bf16.msra.mxu0 %v924
    %1229 = vmatprep.subr.bf16.mxu0 %v929
    %1230 = vmatpush1.bf16.msra.mxu0 %v928
    %1231 = vmatprep.subr.bf16.mxu0 %v933
    %1232 = vmatpush1.bf16.msra.mxu0 %v932
    %1233 = vmatprep.subr.bf16.mxu0 %v937
    %1234 = vmatpush1.bf16.msra.mxu0 %v936
    %1235 = vmatprep.subr.bf16.mxu0 %v941
    %1236 = vmatpush1.bf16.msra.mxu0 %v940
    %1237 = vmatprep.subr.bf16.mxu0 %v945
    %1238 = vmatpush1.bf16.msra.mxu0 %v944
    %1239 = vmatprep.subr.bf16.mxu0 %v949
    %1240 = vmatpush1.bf16.msra.mxu0 %v948
    %1241 = vmatprep.subr.bf16.mxu0 %v953
    %1242 = vmatpush1.bf16.msra.mxu0 %v952
    %1243 = vmatprep.mubr.bf16.mxu0 %v291
    %1244 = vmatmul.mubr.bf16.gmra.mrb[0].mxu0 %v290
    %v1245 = vpop.f32.mrb[0].mxu0
    %v1246 = vadd.f32 %v1203, %v1245
    %v1247 = vpop.f32.mrb[0].mxu0
    %v1248 = vadd.f32 %v1205, %v1247
    %v1249 = vpop.f32.mrb[0].mxu0
    %v1250 = vadd.f32 %v1207, %v1249
    %v1251 = vpop.f32.mrb[0].mxu0
    %v1252 = vadd.f32 %v1209, %v1251
    %1253 = vdwg.mxu0
    %v1254 = vmax.f32 %v1160, 0.0
    %v1255 = vmax.f32 %v1162, 0.0
    %v1256 = vmax.f32 %v1246, 0.0
    %v1257 = vmax.f32 %v1248, 0.0
    %v1258 = vmax.f32 %v1164, 0.0
    %v1259 = vmax.f32 %v1166, 0.0
    %v1260 = vmax.f32 %v1250, 0.0
    %v1261 = vmax.f32 %v1252, 0.0
    %v1262 = vpack.c.bf16 %v1258, %v1254
    %v1263 = vpack.c.bf16 %v1259, %v1255
    %v1264 = vpack.c.bf16 %v1260, %v1256
    %v1265 = vpack.c.bf16 %v1261, %v1257
    %v1266 = vld [vmem:[#allocation11] sm:$0xf]
    %v1267 = vld [vmem:[#allocation11 + $0x4] sm:$0xf]
    %v1268 = vld [vmem:[#allocation11 + $0x8] sm:$0xf]
    %v1269 = vld [vmem:[#allocation11 + $0xc] sm:$0xf]
    %v1270 = vld [vmem:[#allocation11 + $0x10] sm:$0xf]
    %v1271 = vld [vmem:[#allocation11 + $0x14] sm:$0xf]
    %v1272 = vld [vmem:[#allocation11 + $0x18] sm:$0xf]
    %v1273 = vld [vmem:[#allocation11 + $0x1c] sm:$0xf]
    %v1274 = vld [vmem:[#allocation11 + $0x20] sm:$0xf]
    %v1275 = vld [vmem:[#allocation11 + $0x24] sm:$0xf]
    %v1276 = vld [vmem:[#allocation11 + $0x28] sm:$0xf]
    %v1277 = vld [vmem:[#allocation11 + $0x2c] sm:$0xf]
    %v1278 = vld [vmem:[#allocation11 + $0x30] sm:$0xf]
    %v1279 = vld [vmem:[#allocation11 + $0x34] sm:$0xf]
    %v1280 = vld [vmem:[#allocation11 + $0x38] sm:$0xf]
    %v1281 = vld [vmem:[#allocation11 + $0x3c] sm:$0xf]
    %v1282 = vld [vmem:[#allocation11 + $0x40] sm:$0xf]
    %v1283 = vld [vmem:[#allocation11 + $0x44] sm:$0xf]
    %v1284 = vld [vmem:[#allocation11 + $0x48] sm:$0xf]
    %v1285 = vld [vmem:[#allocation11 + $0x4c] sm:$0xf]
    %v1286 = vld [vmem:[#allocation11 + $0x50] sm:$0xf]
    %v1287 = vld [vmem:[#allocation11 + $0x54] sm:$0xf]
    %v1288 = vld [vmem:[#allocation11 + $0x58] sm:$0xf]
    %v1289 = vld [vmem:[#allocation11 + $0x5c] sm:$0xf]
    %v1290 = vld [vmem:[#allocation11 + $0x60] sm:$0xf]
    %v1291 = vld [vmem:[#allocation11 + $0x64] sm:$0xf]
    %v1292 = vld [vmem:[#allocation11 + $0x68] sm:$0xf]
    %v1293 = vld [vmem:[#allocation11 + $0x6c] sm:$0xf]
    %v1294 = vld [vmem:[#allocation11 + $0x70] sm:$0xf]
    %v1295 = vld [vmem:[#allocation11 + $0x74] sm:$0xf]
    %v1296 = vld [vmem:[#allocation11 + $0x78] sm:$0xf]
    %v1297 = vld [vmem:[#allocation11 + $0x7c] sm:$0xf]
    %v1298 = vld [vmem:[#allocation11 + $0x80] sm:$0xf]
    %v1299 = vld [vmem:[#allocation11 + $0x84] sm:$0xf]
    %v1300 = vld [vmem:[#allocation11 + $0x88] sm:$0xf]
    %v1301 = vld [vmem:[#allocation11 + $0x8c] sm:$0xf]
    %v1302 = vld [vmem:[#allocation11 + $0x90] sm:$0xf]
    %v1303 = vld [vmem:[#allocation11 + $0x94] sm:$0xf]
    %v1304 = vld [vmem:[#allocation11 + $0x98] sm:$0xf]
    %v1305 = vld [vmem:[#allocation11 + $0x9c] sm:$0xf]
    %v1306 = vld [vmem:[#allocation11 + $0xa0] sm:$0xf]
    %v1307 = vld [vmem:[#allocation11 + $0xa4] sm:$0xf]
    %v1308 = vld [vmem:[#allocation11 + $0xa8] sm:$0xf]
    %v1309 = vld [vmem:[#allocation11 + $0xac] sm:$0xf]
    %v1310 = vld [vmem:[#allocation11 + $0xb0] sm:$0xf]
    %v1311 = vld [vmem:[#allocation11 + $0xb4] sm:$0xf]
    %v1312 = vld [vmem:[#allocation11 + $0xb8] sm:$0xf]
    %v1313 = vld [vmem:[#allocation11 + $0xbc] sm:$0xf]
    %v1314 = vld [vmem:[#allocation11 + $0xc0] sm:$0xf]
    %v1315 = vld [vmem:[#allocation11 + $0xc4] sm:$0xf]
    %v1316 = vld [vmem:[#allocation11 + $0xc8] sm:$0xf]
    %v1317 = vld [vmem:[#allocation11 + $0xcc] sm:$0xf]
    %v1318 = vld [vmem:[#allocation11 + $0xd0] sm:$0xf]
    %v1319 = vld [vmem:[#allocation11 + $0xd4] sm:$0xf]
    %v1320 = vld [vmem:[#allocation11 + $0xd8] sm:$0xf]
    %v1321 = vld [vmem:[#allocation11 + $0xdc] sm:$0xf]
    %v1322 = vld [vmem:[#allocation11 + $0xe0] sm:$0xf]
    %v1323 = vld [vmem:[#allocation11 + $0xe4] sm:$0xf]
    %v1324 = vld [vmem:[#allocation11 + $0xe8] sm:$0xf]
    %v1325 = vld [vmem:[#allocation11 + $0xec] sm:$0xf]
    %v1326 = vld [vmem:[#allocation11 + $0xf0] sm:$0xf]
    %v1327 = vld [vmem:[#allocation11 + $0xf4] sm:$0xf]
    %v1328 = vld [vmem:[#allocation11 + $0xf8] sm:$0xf]
    %v1329 = vld [vmem:[#allocation11 + $0xfc] sm:$0xf]
    %v1330 = vld [vmem:[#allocation13] sm:$0x1]
    %v1332 = vlaneseq
    %v1333 = vshrl.u32 %v1332, 7
    %v1334 = vsub.s32 0, %v1333
    %v1335 = vrot.slane %v1330, %v1334
    %v1401 = vunpack.c.l.b16 %v1266
    %v1402 = vunpack.c.l.b16 %v1267
    %v1403 = vunpack.c.l.b16 %v1268
    %v1404 = vunpack.c.l.b16 %v1269
    %v1405 = vunpack.c.l.b16 %v1270
    %v1406 = vunpack.c.l.b16 %v1271
    %v1407 = vunpack.c.l.b16 %v1272
    %v1408 = vunpack.c.l.b16 %v1273
    %v1409 = vunpack.c.l.b16 %v1274
    %v1410 = vunpack.c.l.b16 %v1275
    %v1411 = vunpack.c.l.b16 %v1276
    %v1412 = vunpack.c.l.b16 %v1277
    %v1413 = vunpack.c.l.b16 %v1278
    %v1414 = vunpack.c.l.b16 %v1279
    %v1415 = vunpack.c.l.b16 %v1280
    %v1416 = vunpack.c.l.b16 %v1281
    %v1417 = vunpack.c.l.b16 %v1282
    %v1418 = vunpack.c.l.b16 %v1283
    %v1419 = vunpack.c.l.b16 %v1284
    %v1420 = vunpack.c.l.b16 %v1285
    %v1421 = vunpack.c.l.b16 %v1286
    %v1422 = vunpack.c.l.b16 %v1287
    %v1423 = vunpack.c.l.b16 %v1288
    %v1424 = vunpack.c.l.b16 %v1289
    %v1425 = vunpack.c.l.b16 %v1290
    %v1426 = vunpack.c.l.b16 %v1291
    %v1427 = vunpack.c.l.b16 %v1292
    %v1428 = vunpack.c.l.b16 %v1293
    %v1429 = vunpack.c.l.b16 %v1294
    %v1430 = vunpack.c.l.b16 %v1295
    %v1431 = vunpack.c.l.b16 %v1296
    %v1432 = vunpack.c.l.b16 %v1297
    %v1433 = vunpack.c.l.b16 %v1298
    %v1434 = vunpack.c.l.b16 %v1299
    %v1435 = vunpack.c.l.b16 %v1300
    %v1436 = vunpack.c.l.b16 %v1301
    %v1437 = vunpack.c.l.b16 %v1302
    %v1438 = vunpack.c.l.b16 %v1303
    %v1439 = vunpack.c.l.b16 %v1304
    %v1440 = vunpack.c.l.b16 %v1305
    %v1441 = vunpack.c.l.b16 %v1306
    %v1442 = vunpack.c.l.b16 %v1307
    %v1443 = vunpack.c.l.b16 %v1308
    %v1444 = vunpack.c.l.b16 %v1309
    %v1445 = vunpack.c.l.b16 %v1310
    %v1446 = vunpack.c.l.b16 %v1311
    %v1447 = vunpack.c.l.b16 %v1312
    %v1448 = vunpack.c.l.b16 %v1313
    %v1449 = vunpack.c.l.b16 %v1314
    %v1450 = vunpack.c.l.b16 %v1315
    %v1451 = vunpack.c.l.b16 %v1316
    %v1452 = vunpack.c.l.b16 %v1317
    %v1453 = vunpack.c.l.b16 %v1318
    %v1454 = vunpack.c.l.b16 %v1319
    %v1455 = vunpack.c.l.b16 %v1320
    %v1456 = vunpack.c.l.b16 %v1321
    %v1457 = vunpack.c.l.b16 %v1322
    %v1458 = vunpack.c.l.b16 %v1323
    %v1459 = vunpack.c.l.b16 %v1324
    %v1460 = vunpack.c.l.b16 %v1325
    %v1461 = vunpack.c.l.b16 %v1326
    %v1462 = vunpack.c.l.b16 %v1327
    %v1463 = vunpack.c.l.b16 %v1328
    %v1464 = vunpack.c.l.b16 %v1329
    %v1465 = vpack.c.b16 %v1402, %v1401
    %v1466 = vpack.c.b16 %v1404, %v1403
    %v1467 = vpack.c.b16 %v1406, %v1405
    %v1468 = vpack.c.b16 %v1408, %v1407
    %v1469 = vpack.c.b16 %v1410, %v1409
    %v1470 = vpack.c.b16 %v1412, %v1411
    %v1471 = vpack.c.b16 %v1414, %v1413
    %v1472 = vpack.c.b16 %v1416, %v1415
    %v1473 = vpack.c.b16 %v1418, %v1417
    %v1474 = vpack.c.b16 %v1420, %v1419
    %v1475 = vpack.c.b16 %v1422, %v1421
    %v1476 = vpack.c.b16 %v1424, %v1423
    %v1477 = vpack.c.b16 %v1426, %v1425
    %v1478 = vpack.c.b16 %v1428, %v1427
    %v1479 = vpack.c.b16 %v1430, %v1429
    %v1480 = vpack.c.b16 %v1432, %v1431
    %v1481 = vpack.c.b16 %v1434, %v1433
    %v1482 = vpack.c.b16 %v1436, %v1435
    %v1483 = vpack.c.b16 %v1438, %v1437
    %v1484 = vpack.c.b16 %v1440, %v1439
    %v1485 = vpack.c.b16 %v1442, %v1441
    %v1486 = vpack.c.b16 %v1444, %v1443
    %v1487 = vpack.c.b16 %v1446, %v1445
    %v1488 = vpack.c.b16 %v1448, %v1447
    %v1489 = vpack.c.b16 %v1450, %v1449
    %v1490 = vpack.c.b16 %v1452, %v1451
    %v1491 = vpack.c.b16 %v1454, %v1453
    %v1492 = vpack.c.b16 %v1456, %v1455
    %v1493 = vpack.c.b16 %v1458, %v1457
    %v1494 = vpack.c.b16 %v1460, %v1459
    %v1495 = vpack.c.b16 %v1462, %v1461
    %v1496 = vpack.c.b16 %v1464, %v1463
    %1529 = vmatprep.subr.bf16.mxu0 0
    %1530 = vmatpush1.bf16.msra.mxu0 %v1465
    %1531 = vmatprep.subr.bf16.mxu0 0
    %1532 = vmatpush1.bf16.msra.mxu0 %v1466
    %1533 = vmatprep.subr.bf16.mxu0 0
    %1534 = vmatpush1.bf16.msra.mxu0 %v1467
    %1535 = vmatprep.subr.bf16.mxu0 0
    %1536 = vmatpush1.bf16.msra.mxu0 %v1468
    %1537 = vmatprep.subr.bf16.mxu0 0
    %1538 = vmatpush1.bf16.msra.mxu0 %v1469
    %1539 = vmatprep.subr.bf16.mxu0 0
    %1540 = vmatpush1.bf16.msra.mxu0 %v1470
    %1541 = vmatprep.subr.bf16.mxu0 0
    %1542 = vmatpush1.bf16.msra.mxu0 %v1471
    %1543 = vmatprep.subr.bf16.mxu0 0
    %1544 = vmatpush1.bf16.msra.mxu0 %v1472
    %1545 = vmatprep.subr.bf16.mxu0 0
    %1546 = vmatpush1.bf16.msra.mxu0 %v1473
    %1547 = vmatprep.subr.bf16.mxu0 0
    %1548 = vmatpush1.bf16.msra.mxu0 %v1474
    %1549 = vmatprep.subr.bf16.mxu0 0
    %1550 = vmatpush1.bf16.msra.mxu0 %v1475
    %1551 = vmatprep.subr.bf16.mxu0 0
    %1552 = vmatpush1.bf16.msra.mxu0 %v1476
    %1553 = vmatprep.subr.bf16.mxu0 0
    %1554 = vmatpush1.bf16.msra.mxu0 %v1477
    %1555 = vmatprep.subr.bf16.mxu0 0
    %1556 = vmatpush1.bf16.msra.mxu0 %v1478
    %1557 = vmatprep.subr.bf16.mxu0 0
    %1558 = vmatpush1.bf16.msra.mxu0 %v1479
    %1559 = vmatprep.subr.bf16.mxu0 0
    %1560 = vmatpush1.bf16.msra.mxu0 %v1480
    %1561 = vmatprep.mubr.bf16.mxu0 %v1263
    %1562 = vmatmul.mubr.bf16.gmra.mrb[0].mxu0 %v1262
    %v1563 = vpop.f32.mrb[0].mxu0
    %v1564 = vadd.f32 %v1335, %v1563
    %v1565 = vpop.f32.mrb[0].mxu0
    %v1566 = vpop.f32.mrb[0].mxu0
    %v1567 = vadd.f32 %v1335, %v1566
    %v1568 = vpop.f32.mrb[0].mxu0
    %1569 = vdwg.mxu0
    %1570 = vmatprep.subr.bf16.mxu0 0
    %1571 = vmatpush1.bf16.msra.mxu0 %v1481
    %1572 = vmatprep.subr.bf16.mxu0 0
    %1573 = vmatpush1.bf16.msra.mxu0 %v1482
    %1574 = vmatprep.subr.bf16.mxu0 0
    %1575 = vmatpush1.bf16.msra.mxu0 %v1483
    %1576 = vmatprep.subr.bf16.mxu0 0
    %1577 = vmatpush1.bf16.msra.mxu0 %v1484
    %1578 = vmatprep.subr.bf16.mxu0 0
    %1579 = vmatpush1.bf16.msra.mxu0 %v1485
    %1580 = vmatprep.subr.bf16.mxu0 0
    %1581 = vmatpush1.bf16.msra.mxu0 %v1486
    %1582 = vmatprep.subr.bf16.mxu0 0
    %1583 = vmatpush1.bf16.msra.mxu0 %v1487
    %1584 = vmatprep.subr.bf16.mxu0 0
    %1585 = vmatpush1.bf16.msra.mxu0 %v1488
    %1586 = vmatprep.subr.bf16.mxu0 0
    %1587 = vmatpush1.bf16.msra.mxu0 %v1489
    %1588 = vmatprep.subr.bf16.mxu0 0
    %1589 = vmatpush1.bf16.msra.mxu0 %v1490
    %1590 = vmatprep.subr.bf16.mxu0 0
    %1591 = vmatpush1.bf16.msra.mxu0 %v1491
    %1592 = vmatprep.subr.bf16.mxu0 0
    %1593 = vmatpush1.bf16.msra.mxu0 %v1492
    %1594 = vmatprep.subr.bf16.mxu0 0
    %1595 = vmatpush1.bf16.msra.mxu0 %v1493
    %1596 = vmatprep.subr.bf16.mxu0 0
    %1597 = vmatpush1.bf16.msra.mxu0 %v1494
    %1598 = vmatprep.subr.bf16.mxu0 0
    %1599 = vmatpush1.bf16.msra.mxu0 %v1495
    %1600 = vmatprep.subr.bf16.mxu0 0
    %1601 = vmatpush1.bf16.msra.mxu0 %v1496
    %1602 = vmatprep.mubr.bf16.mxu0 %v1265
    %1603 = vmatmul.mubr.bf16.gmra.mrb[0].mxu0 %v1264
    %v1604 = vpop.f32.mrb[0].mxu0
    %v1605 = vadd.f32 %v1564, %v1604
    %v1606 = vpop.f32.mrb[0].mxu0
    %v1607 = vpop.f32.mrb[0].mxu0
    %v1608 = vadd.f32 %v1567, %v1607
    %v1609 = vpop.f32.mrb[0].mxu0
    %1610 = vdwg.mxu0
    %v1611 = vpack.c.bf16 %v1608, %v1605
    %v1613 = vunpack.c.l.b16 %v1611
    %v1614 = vunpack.c.h.b16 %v1611
    %v1615 = vpack.c.b16 %v1613, %v1613
    %v1616 = vpack.c.b16 %v1614, %v1614
    %1619 = vst [vmem:[#allocation14] sm:$0xf] %v1615
    %1620 = vst [vmem:[#allocation14 + $0x4] sm:$0xf] %v1616
    // Predicated region
    $region58: #{_forward_impl.1} parent=1 // pred_check
      _
    $region59: #{_forward_impl.1} parent=1 // pred_check_branch
      %1622 = sbr.rel (0) target = $region61
    $region60: #{_forward_impl.1} parent=1 // pred_region
      %s1624 = ssub.s32 128, 128
      %1625 = vsyncadd [#allocation4], %s1624
      %s1626 = sshll.u32 [#allocation14], 4
      %s1627 = int_to_ptr.vmem [resolvable:$true] %s1626
      %1632 = dma.vmem_to_hbm [thread:$0]  %s1627, 128, %s7, [#allocation4], 64, 64, 4
    $region61: #{_forward_impl.1} parent=1 // pred_fallthru
      _
    // Predicated region
    $region62: #{_forward_impl.1} parent=1 // pred_check
      _
    $region63: #{_forward_impl.1} parent=1 // pred_check_branch
      %1634 = sbr.rel (0) target = $region65
    $region64: #{_forward_impl.1} parent=1 // pred_region
      %1635 = dma.done [#allocation4], 128
    $region65: #{_forward_impl.1} parent=1 // pred_fallthru
      _
    %1636 = vsyncpa [#allocation3], 1
    %1637 = vsyncpa [#allocation6], 1
    %1638 = vsyncpa [#allocation9], 1
    %1639 = vsyncpa [#allocation12], 1
    %1640 = vsyncpa [#allocation4], 1

</llo_original>
